<compile_context>
chip_gen: v7x
topology: tpu7x:2x2x1
jax: 0.10.0
libtpu: 0.0.40
codegen_flags: <defaults>
</compile_context>

<pallas_src>
import functools

import jax
import jax.numpy as jnp
from jax.experimental import pallas as pl
from jax.experimental.pallas import tpu as pltpu


def _round_up(n, m):
    return ((n + m - 1) // m) * m


# ---------------- Pass 1: per-feature stats (nanmean + unbiased std) ---------
def feature_stats_kernel(x_ref, mean_ref, inv_std_ref,
                         cnt_acc, sum_acc, ssq_acc, *, m_total):
    i = pl.program_id(0)

    @pl.when(i == 0)
    def _init():
        cnt_acc[...] = jnp.zeros_like(cnt_acc)
        sum_acc[...] = jnp.zeros_like(sum_acc)
        ssq_acc[...] = jnp.zeros_like(ssq_acc)

    x = x_ref[...]                                        # (TILE_M, F) f32
    valid = jnp.logical_not(jnp.isnan(x))
    xz = jnp.where(valid, x, 0.0)
    cnt_acc[...] += jnp.sum(valid.astype(jnp.float32), axis=0, keepdims=True)
    sum_acc[...] += jnp.sum(xz, axis=0, keepdims=True)
    ssq_acc[...] += jnp.sum(xz * xz, axis=0, keepdims=True)

    @pl.when(i == pl.num_programs(0) - 1)
    def _finalize():
        cnt = cnt_acc[...]
        mean = sum_acc[...] / cnt                         # per-feature nanmean
        # After centering + nan_to_num, sum(xc) == 0 in exact arithmetic, so
        # torch.std's recomputed mean vanishes: var = (sumsq - cnt*mean^2)/(M-1).
        var = (ssq_acc[...] - cnt * mean * mean) / jnp.float32(m_total - 1)
        std = jnp.sqrt(jnp.maximum(var, 0.0))             # clamp fp cancellation
        mean_ref[...] = mean
        inv_std_ref[...] = 1.0 / (std + 1e-6)


# ---------------- Pass 2: per-tile normalize + MLP ----------------------------
def mlp_tile_kernel(mean_ref, inv_std_ref, x_ref,
                    w1_ref, b1_ref, w2_ref, b2_ref, w3_ref, b3_ref,
                    w4_ref, b4_ref, o_ref):
    x = x_ref[...]                                        # (TILE_M, F) f32
    # (x - nanmean), nan_to_num(0), / (std + 1e-6)   -- all in f32 on the VPU
    xc = jnp.where(jnp.isnan(x), 0.0, x - mean_ref[...])
    xn = xc * inv_std_ref[...]

    # input_layer + ReLU (+ dropout: identity in eval mode)
    # TODO(synk): training-mode dropout (mask + 1/(1-p) scale) not implemented.
    h = jnp.dot(xn.astype(jnp.bfloat16), w1_ref[...],
                preferred_element_type=jnp.float32)
    h = jnp.maximum(h + b1_ref[...], 0.0)

    # hidden_layers: (Linear, ReLU) x 2
    h = jnp.dot(h.astype(jnp.bfloat16), w2_ref[...],
                preferred_element_type=jnp.float32)
    h = jnp.maximum(h + b2_ref[...], 0.0)
    h = jnp.dot(h.astype(jnp.bfloat16), w3_ref[...],
                preferred_element_type=jnp.float32)
    h = jnp.maximum(h + b3_ref[...], 0.0)

    # output_layer (lane-dense: padded to a multiple of 128 output columns)
    o_ref[...] = (jnp.dot(h.astype(jnp.bfloat16), w4_ref[...],
                          preferred_element_type=jnp.float32)
                  + b4_ref[...]).astype(o_ref.dtype)


def mlp_forward(x, params, *, tile_m=512):
    """x: (B, T, F) float32.  Returns (B, T, output_dim) float32."""
    B, T, F = x.shape
    M = B * T
    (w1, b1), (w2, b2), (w3, b3), (w4, b4) = params
    H = w1.shape[1]
    out_dim = w4.shape[1]
    o_pad = _round_up(out_dim, 128)          # lane-dense output slab

    # Row tiling: multiple of 8 sublanes; pad M with NaN rows so every block is
    # full.  NaN rows are excluded by the nan-aware stats (divisor uses the real
    # M) and normalize to 0, so padded output rows are harmless and sliced off.
    tile_m = min(tile_m, _round_up(M, 8))
    m_pad = _round_up(M, tile_m)
    n_tiles = m_pad // tile_m

    x2d = x.reshape(M, F)
    if m_pad != M:
        pad = jnp.full((m_pad - M, F), jnp.nan, dtype=x2d.dtype)
        x2d = jnp.concatenate([x2d, pad], axis=0)

    # ---- pass 1: per-feature stats ------------------------------------------
    mean, inv_std = pl.pallas_call(
        functools.partial(feature_stats_kernel, m_total=M),
        out_shape=(jax.ShapeDtypeStruct((1, F), jnp.float32),
                   jax.ShapeDtypeStruct((1, F), jnp.float32)),
        grid=(n_tiles,),
        in_specs=[pl.BlockSpec((tile_m, F), lambda i: (i, 0))],
        out_specs=(pl.BlockSpec((1, F), lambda i: (0, 0)),
                   pl.BlockSpec((1, F), lambda i: (0, 0))),
        scratch_shapes=[pltpu.VMEM((1, F), jnp.float32)] * 3,
        compiler_params=pltpu.CompilerParams(
            dimension_semantics=("arbitrary",),
            vmem_limit_bytes=32 * 1024 * 1024),
    )(x2d)

    # ---- pass 2: tiled normalize + MLP --------------------------------------
    # bf16 matmul operands (f32 accumulate); output layer zero-padded to o_pad.
    w1b, w2b, w3b = (w.astype(jnp.bfloat16) for w in (w1, w2, w3))
    w4b = jnp.zeros((H, o_pad), jnp.bfloat16).at[:, :out_dim].set(
        w4.astype(jnp.bfloat16))
    b4p = jnp.zeros((1, o_pad), jnp.float32).at[:, :out_dim].set(b4)

    flops = 2 * m_pad * (F * H + 2 * H * H + H * o_pad)
    bytes_accessed = (m_pad * F * 4 + m_pad * o_pad * 4 + 2 * F * 4
                      + 2 * (F * H + 2 * H * H + H * o_pad)
                      + 4 * (3 * H + o_pad))

    # Rough VMEM budget: double-buffered x/out tiles + resident weights/biases/
    # stats with (8,128)-tile padding, 2x headroom; capped at the 32 MiB scoped
    # default of v6e/v7x (well under all physical limits).
    lane = lambda n: _round_up(n, 128)
    sub = lambda n: _round_up(n, 8)
    est = (2 * sub(tile_m) * (lane(F) + lane(o_pad)) * 4
           + 2 * (sub(F) * lane(H) + 2 * sub(H) * lane(H) + sub(H) * lane(o_pad))
           + 4 * 8 * (3 * lane(H) + lane(o_pad) + 2 * lane(F)))
    vmem_limit = int(min(32 * 1024 * 1024, max(8 * 1024 * 1024, 2 * est)))

    const = lambda i: (0, 0)
    out_padded = pl.pallas_call(
        mlp_tile_kernel,
        out_shape=jax.ShapeDtypeStruct((m_pad, o_pad), jnp.float32),
        grid=(n_tiles,),
        in_specs=[
            pl.BlockSpec((1, F), const),                   # mean    (resident)
            pl.BlockSpec((1, F), const),                   # inv_std (resident)
            pl.BlockSpec((tile_m, F), lambda i: (i, 0)),   # x tile (pipelined)
            pl.BlockSpec((F, H), const), pl.BlockSpec((1, H), const),      # w1,b1
            pl.BlockSpec((H, H), const), pl.BlockSpec((1, H), const),      # w2,b2
            pl.BlockSpec((H, H), const), pl.BlockSpec((1, H), const),      # w3,b3
            pl.BlockSpec((H, o_pad), const), pl.BlockSpec((1, o_pad), const),
        ],
        out_specs=pl.BlockSpec((tile_m, o_pad), lambda i: (i, 0)),
        compiler_params=pltpu.CompilerParams(
            dimension_semantics=("parallel",),
            vmem_limit_bytes=vmem_limit),
        cost_estimate=pl.CostEstimate(flops=flops, transcendentals=0,
                                      bytes_accessed=bytes_accessed),
    )(mean, inv_std, x2d, w1b, b1, w2b, b2, w3b, b3, w4b, b4p)

    # .squeeze() in the torch module is a no-op for shapes with no size-1 dims.
    return out_padded[:M, :out_dim].reshape(B, T, out_dim)


def init_params(key, input_dim, hidden_dim, output_dim):
    """Deterministic Linear params.  Stored as (in, out) + (1, out) bias."""
    def linear(k, fan_in, fan_out):
        kw, kb = jax.random.split(k)
        bound = 1.0 / jnp.sqrt(fan_in)
        w = jax.random.uniform(kw, (fan_in, fan_out), jnp.float32, -bound, bound)
        b = jax.random.uniform(kb, (1, fan_out), jnp.float32, -bound, bound)
        return w, b

    k1, k2, k3, k4 = jax.random.split(key, 4)
    return (linear(k1, input_dim, hidden_dim),
            linear(k2, hidden_dim, hidden_dim),
            linear(k3, hidden_dim, hidden_dim),
            linear(k4, hidden_dim, output_dim))


def reference_forward(x, params):
    """Pure-JAX f32 reference mirroring the torch forward (eval mode)."""
    B, T, F = x.shape
    x2 = x.reshape(B * T, F)
    cnt = jnp.sum(~jnp.isnan(x2), axis=0, keepdims=True).astype(jnp.float32)
    s = jnp.nansum(x2, axis=0, keepdims=True)
    xc = x2 - s / cnt
    xc = jnp.nan_to_num(xc, nan=0.0)
    std = jnp.std(xc, axis=0, keepdims=True, ddof=1)
    xn = xc / (std + 1e-6)
    (w1, b1), (w2, b2), (w3, b3), (w4, b4) = params
    h = jnp.maximum(xn @ w1 + b1, 0.0)
    h = jnp.maximum(h @ w2 + b2, 0.0)
    h = jnp.maximum(h @ w3 + b3, 0.0)
    return (h @ w4 + b4).reshape(B, T, -1)


if __name__ == "__main__":
    config = dict(input_dim=16, hidden_dim=32, output_dim=4, dropout=0.1)
    B, T = 2, 8

    key = jax.random.PRNGKey(0)
    kx, kp = jax.random.split(key)
    x = jax.random.normal(kx, (B, T, config["input_dim"]), dtype=jnp.float32)
    # a couple of NaNs to exercise the nanmean / nan_to_num path
    x = x.at[0, 0, 3].set(jnp.nan).at[1, 5, 7].set(jnp.nan)

    params = init_params(kp, config["input_dim"], config["hidden_dim"],
                         config["output_dim"])

    out = mlp_forward(x, params)
    out = jax.block_until_ready(out)

    ref = reference_forward(x, params)
    assert out.shape == (B, T, config["output_dim"])
    assert bool(jnp.all(jnp.isfinite(out)))
    # bf16 matmul inputs (f32 accumulation) => compare against the pure-f32
    # reference at a bf16-appropriate tolerance.
    assert jnp.allclose(out, ref, atol=2e-2, rtol=2e-2), "mismatch vs reference"

    print("KERNEL_OK")
</pallas_src>

<mosaic_0001>
module attributes {stable_mosaic.version = 11 : i64} {
  func.func @feature_stats_kernel(%arg0: i32, %arg1: memref<16x16xf32, #tpu.memory_space<vmem>>, %arg2: memref<1x16xf32, #tpu.memory_space<vmem>>, %arg3: memref<1x16xf32, #tpu.memory_space<vmem>>, %arg4: memref<1x16xf32, #tpu.memory_space<vmem>>, %arg5: memref<1x16xf32, #tpu.memory_space<vmem>>, %arg6: memref<1x16xf32, #tpu.memory_space<vmem>>) attributes {dimension_semantics = [#tpu.dimension_semantics<arbitrary>], iteration_bounds = array<i64: 1>, scalar_prefetch = 0 : i64, scratch_operands = 3 : i64, tpu.core_type = #tpu.core_type<tc>, window_params = [{transform_indices = @transform_0, window_bounds = array<i64: 16, 16>}, {pipeline_mode = #tpu.pipeline_mode<synchronous>, transform_indices = @transform_1, window_bounds = array<i64: 1, 16>}, {pipeline_mode = #tpu.pipeline_mode<synchronous>, transform_indices = @transform_2, window_bounds = array<i64: 1, 16>}]} {
    %c0_i32 = arith.constant 0 : i32
    %0 = arith.cmpi eq, %arg0, %c0_i32 : i32
    %1 = arith.extui %0 : i1 to i32
    %c0_i32_0 = arith.constant 0 : i32
    %2 = arith.cmpi ne, %1, %c0_i32_0 : i32
    scf.if %2 {
      %cst_20 = arith.constant 0.000000e+00 : f32
      %29 = vector.broadcast %cst_20 : f32 to vector<1x16xf32>
      %c0_21 = arith.constant 0 : index
      %c0_22 = arith.constant 0 : index
      %30 = vector.load %arg4[%c0_21, %c0_22] : memref<1x16xf32, #tpu.memory_space<vmem>>, vector<1x16xf32>
      tpu.vector_store %arg4[%c0_21, %c0_22], %29 {strides = array<i32>} : memref<1x16xf32, #tpu.memory_space<vmem>>, vector<1x16xf32>,
      %cst_23 = arith.constant 0.000000e+00 : f32
      %31 = vector.broadcast %cst_23 : f32 to vector<1x16xf32>
      %c0_24 = arith.constant 0 : index
      %c0_25 = arith.constant 0 : index
      %32 = vector.load %arg5[%c0_24, %c0_25] : memref<1x16xf32, #tpu.memory_space<vmem>>, vector<1x16xf32>
      tpu.vector_store %arg5[%c0_24, %c0_25], %31 {strides = array<i32>} : memref<1x16xf32, #tpu.memory_space<vmem>>, vector<1x16xf32>,
      %cst_26 = arith.constant 0.000000e+00 : f32
      %33 = vector.broadcast %cst_26 : f32 to vector<1x16xf32>
      %c0_27 = arith.constant 0 : index
      %c0_28 = arith.constant 0 : index
      %34 = vector.load %arg6[%c0_27, %c0_28] : memref<1x16xf32, #tpu.memory_space<vmem>>, vector<1x16xf32>
      tpu.vector_store %arg6[%c0_27, %c0_28], %33 {strides = array<i32>} : memref<1x16xf32, #tpu.memory_space<vmem>>, vector<1x16xf32>,
    } else {
    }
    %c0 = arith.constant 0 : index
    %c0_1 = arith.constant 0 : index
    %3 = vector.load %arg1[%c0, %c0_1] : memref<16x16xf32, #tpu.memory_space<vmem>>, vector<16x16xf32>
    %4 = arith.cmpf one, %3, %3 : vector<16x16xf32>
    %cst = arith.constant dense<true> : vector<16x16xi1>
    %5 = arith.xori %4, %cst : vector<16x16xi1>
    %cst_2 = arith.constant 0.000000e+00 : f32
    %6 = vector.broadcast %cst_2 : f32 to vector<16x16xf32>
    %7 = arith.select %5, %3, %6 : vector<16x16xi1>, vector<16x16xf32>
    %c0_3 = arith.constant 0 : index
    %c0_4 = arith.constant 0 : index
    %8 = vector.load %arg4[%c0_3, %c0_4] : memref<1x16xf32, #tpu.memory_space<vmem>>, vector<1x16xf32>
    %9 = arith.extui %5 : vector<16x16xi1> to vector<16x16xi32>
    %10 = arith.sitofp %9 : vector<16x16xi32> to vector<16x16xf32>
    %cst_5 = arith.constant dense<0.000000e+00> : vector<16xf32>
    %11 = vector.multi_reduction <add>, %10, %cst_5 [0] : vector<16x16xf32> to vector<16xf32>
    %12 = vector.shape_cast %11 : vector<16xf32> to vector<1x16xf32>
    %13 = arith.addf %8, %12 : vector<1x16xf32>
    %c0_6 = arith.constant 0 : index
    %c0_7 = arith.constant 0 : index
    %14 = vector.load %arg4[%c0_6, %c0_7] : memref<1x16xf32, #tpu.memory_space<vmem>>, vector<1x16xf32>
    tpu.vector_store %arg4[%c0_6, %c0_7], %13 {strides = array<i32>} : memref<1x16xf32, #tpu.memory_space<vmem>>, vector<1x16xf32>,
    %c0_8 = arith.constant 0 : index
    %c0_9 = arith.constant 0 : index
    %15 = vector.load %arg5[%c0_8, %c0_9] : memref<1x16xf32, #tpu.memory_space<vmem>>, vector<1x16xf32>
    %cst_10 = arith.constant dense<0.000000e+00> : vector<16xf32>
    %16 = vector.multi_reduction <add>, %7, %cst_10 [0] : vector<16x16xf32> to vector<16xf32>
    %17 = vector.shape_cast %16 : vector<16xf32> to vector<1x16xf32>
    %18 = arith.addf %15, %17 : vector<1x16xf32>
    %c0_11 = arith.constant 0 : index
    %c0_12 = arith.constant 0 : index
    %19 = vector.load %arg5[%c0_11, %c0_12] : memref<1x16xf32, #tpu.memory_space<vmem>>, vector<1x16xf32>
    tpu.vector_store %arg5[%c0_11, %c0_12], %18 {strides = array<i32>} : memref<1x16xf32, #tpu.memory_space<vmem>>, vector<1x16xf32>,
    %c0_13 = arith.constant 0 : index
    %c0_14 = arith.constant 0 : index
    %20 = vector.load %arg6[%c0_13, %c0_14] : memref<1x16xf32, #tpu.memory_space<vmem>>, vector<1x16xf32>
    %21 = arith.mulf %7, %7 : vector<16x16xf32>
    %cst_15 = arith.constant dense<0.000000e+00> : vector<16xf32>
    %22 = vector.multi_reduction <add>, %21, %cst_15 [0] : vector<16x16xf32> to vector<16xf32>
    %23 = vector.shape_cast %22 : vector<16xf32> to vector<1x16xf32>
    %24 = arith.addf %20, %23 : vector<1x16xf32>
    %c0_16 = arith.constant 0 : index
    %c0_17 = arith.constant 0 : index
    %25 = vector.load %arg6[%c0_16, %c0_17] : memref<1x16xf32, #tpu.memory_space<vmem>>, vector<1x16xf32>
    tpu.vector_store %arg6[%c0_16, %c0_17], %24 {strides = array<i32>} : memref<1x16xf32, #tpu.memory_space<vmem>>, vector<1x16xf32>,
    %c0_i32_18 = arith.constant 0 : i32
    %26 = arith.cmpi eq, %arg0, %c0_i32_18 : i32
    %27 = arith.extui %26 : i1 to i32
    %c0_i32_19 = arith.constant 0 : i32
    %28 = arith.cmpi ne, %27, %c0_i32_19 : i32
    scf.if %28 {
      %c0_20 = arith.constant 0 : index
      %c0_21 = arith.constant 0 : index
      %29 = vector.load %arg4[%c0_20, %c0_21] : memref<1x16xf32, #tpu.memory_space<vmem>>, vector<1x16xf32>
      %c0_22 = arith.constant 0 : index
      %c0_23 = arith.constant 0 : index
      %30 = vector.load %arg5[%c0_22, %c0_23] : memref<1x16xf32, #tpu.memory_space<vmem>>, vector<1x16xf32>
      %31 = arith.divf %30, %29 : vector<1x16xf32>
      %c0_24 = arith.constant 0 : index
      %c0_25 = arith.constant 0 : index
      %32 = vector.load %arg6[%c0_24, %c0_25] : memref<1x16xf32, #tpu.memory_space<vmem>>, vector<1x16xf32>
      %33 = arith.mulf %29, %31 : vector<1x16xf32>
      %34 = arith.mulf %33, %31 : vector<1x16xf32>
      %35 = arith.subf %32, %34 : vector<1x16xf32>
      %cst_26 = arith.constant 1.500000e+01 : f32
      %36 = vector.broadcast %cst_26 : f32 to vector<1x16xf32>
      %37 = arith.divf %35, %36 : vector<1x16xf32>
      %cst_27 = arith.constant 0.000000e+00 : f32
      %38 = vector.broadcast %cst_27 : f32 to vector<1x16xf32>
      %39 = arith.maximumf %37, %38 : vector<1x16xf32>
      %40 = math.sqrt %39 : vector<1x16xf32>
      %c0_28 = arith.constant 0 : index
      %c0_29 = arith.constant 0 : index
      %41 = vector.load %arg2[%c0_28, %c0_29] : memref<1x16xf32, #tpu.memory_space<vmem>>, vector<1x16xf32>
      tpu.vector_store %arg2[%c0_28, %c0_29], %31 {strides = array<i32>} : memref<1x16xf32, #tpu.memory_space<vmem>>, vector<1x16xf32>,
      %cst_30 = arith.constant 9.99999997E-7 : f32
      %42 = vector.broadcast %cst_30 : f32 to vector<1x16xf32>
      %43 = arith.addf %40, %42 : vector<1x16xf32>
      %cst_31 = arith.constant 1.000000e+00 : f32
      %44 = vector.broadcast %cst_31 : f32 to vector<1x16xf32>
      %45 = arith.divf %44, %43 : vector<1x16xf32>
      %c0_32 = arith.constant 0 : index
      %c0_33 = arith.constant 0 : index
      %46 = vector.load %arg3[%c0_32, %c0_33] : memref<1x16xf32, #tpu.memory_space<vmem>>, vector<1x16xf32>
      tpu.vector_store %arg3[%c0_32, %c0_33], %45 {strides = array<i32>} : memref<1x16xf32, #tpu.memory_space<vmem>>, vector<1x16xf32>,
    } else {
    }
    return
  }
  func.func @transform_0(%arg0: i32) -> (i32, i32) {
    %c0_i32 = arith.constant 0 : i32
    %c0_i32_0 = arith.constant 0 : i32
    return %arg0, %c0_i32 : i32, i32
  }
  func.func @transform_1(%arg0: i32) -> (i32, i32) {
    %c0_i32 = arith.constant 0 : i32
    %c0_i32_0 = arith.constant 0 : i32
    %c0_i32_1 = arith.constant 0 : i32
    return %c0_i32, %c0_i32_0 : i32, i32
  }
  func.func @transform_2(%arg0: i32) -> (i32, i32) {
    %c0_i32 = arith.constant 0 : i32
    %c0_i32_0 = arith.constant 0 : i32
    %c0_i32_1 = arith.constant 0 : i32
    return %c0_i32, %c0_i32_0 : i32, i32
  }
}

</mosaic_0001>

<llo_original>
// kernel: tpu_custom_call.1
$region0: #{tpu_custom_call.1}
  #allocation0 [shape = 'u32[]', space=smem, size = 0x4, offset = 0x4, fixed_abs, tag = 'smem constant byte address 0x4 - core index']
  #allocation1 [shape = 'u32[144,128]{1,0:T(1,128)}', space=vmem, size = 0x12000, scoped, tag = 'internal scratch']
  #allocation2 [shape = 'f32[1,16]{1,0:T(1,128)}', space=vmem, size = 0x200, scoped, tag = 'scratch operand']
  #allocation3 [shape = 'f32[1,16]{1,0:T(1,128)}', space=vmem, size = 0x200, scoped, tag = 'scratch operand']
  #allocation4 [shape = 'f32[1,16]{1,0:T(1,128)}', space=vmem, size = 0x200, scoped, tag = 'scratch operand']
  %s0 = inlined_call_operand.hbm [shape: f32[16,16], index: 0, kind: input, shape index: {}]
  %s1 = inlined_call_operand.hbm [shape: f32[1,16], index: 1, kind: output, shape index: {0}]
  %s2 = inlined_call_operand.hbm [shape: f32[1,16], index: 2, kind: output, shape index: {1}]
  %3 = xla_tuple %s1, %s2
  %s4 = sld [smem:[#allocation0]]
  $region34: #{tpu_custom_call.1} parent=0
    _
  %s6 = ssub.s32 1, %s4
  %s7 = scalar_select 0, %s6, %s4
  $region1: #{tpu_custom_call.1} parent=0
    #allocation5 [shape = 'u8[8192]{0}', space=vmem, size = 0x2000, scoped, tag = 'input window, operand 0, single buffered']
    #allocation6 [shape = 's32[1]{0}', space=sflag, size = 0x4, scoped, tag = 'scoped memory for tpu_custom_call.1']
    #allocation7 [shape = 's32[1]{0}', space=sflag, size = 0x4, scoped, tag = 'scoped memory for tpu_custom_call.1']
    #allocation8 [shape = 'u8[512]{0}', space=vmem, size = 0x400, scoped, tag = 'output window, operand 0, single buffered']
    #allocation9 [shape = 'u8[512]{0}', space=vmem, size = 0x400, scoped, tag = 'output window, operand 1, single buffered']
    #allocation10 [shape = 's32[1]{0}', space=sflag, size = 0x4, scoped, tag = 'scoped memory for tpu_custom_call.1']
    %8 = vsyncpa [#allocation6], 0
    %9 = vsyncpa [#allocation7], 0
    %10 = vsyncpa [#allocation10], 0
    // Predicated region
    $region2: #{tpu_custom_call.1} parent=1 // pred_check
      _
    $region3: #{tpu_custom_call.1} parent=1 // pred_check_branch
      %12 = sbr.rel (0) target = $region5
    $region4: #{tpu_custom_call.1} parent=1 // pred_region
      %s14 = ssub.s32 256, 256
      %15 = vsyncadd [#allocation6], %s14
      %s16 = sshll.u32 [#allocation5], 4
      %s17 = int_to_ptr.vmem [resolvable:$true] %s16
      %22 = dma.hbm_to_vmem [thread:$0]  %s0, 256, %s17, [#allocation6], 128, 128, 8
    $region5: #{tpu_custom_call.1} parent=1 // pred_fallthru
      _
    // Predicated region
    $region6: #{tpu_custom_call.1} parent=1 // pred_check
      _
    $region7: #{tpu_custom_call.1} parent=1 // pred_check_branch
      %24 = sbr.rel (0) target = $region9
    $region8: #{tpu_custom_call.1} parent=1 // pred_region
      %25 = dma.done [#allocation6], 256
    $region9: #{tpu_custom_call.1} parent=1 // pred_fallthru
      _
    %p26 = scmp.eq.s32.totalorder 0, 0
    // Predicated region
    $region10: #{tpu_custom_call.1} parent=1 // pred_check
      %p27 = pneg %p26
    $region11: #{tpu_custom_call.1} parent=1 // pred_check_branch
      %29 = sbr.rel (%p27) target = $region13
    $region12: #{tpu_custom_call.1} parent=1 // pred_region
      %vm30 = vcmask 122880
      %31 = vst.msk [vmem:[#allocation2] sm:$0x1] %vm30, 0.0
      %32 = vst.msk [vmem:[#allocation3] sm:$0x1] %vm30, 0.0
      %33 = vst.msk [vmem:[#allocation4] sm:$0x1] %vm30, 0.0
    $region13: #{tpu_custom_call.1} parent=1 // pred_fallthru
      _
    %v34 = vld [vmem:[#allocation5] sm:$0xff]
    %v35 = vld [vmem:[#allocation5 + $0x8] sm:$0xff]
    %vm36 = vcmp.ne.f32.partialorder %v34, %v34
    %vm37 = vcmp.ne.f32.partialorder %v35, %v35
    %vm38 = vmxor %vm36, 1
    %vm39 = vmxor %vm37, 1
    %v40 = vsel %vm38, %v34, 0.0
    %v41 = vsel %vm39, %v35, 0.0
    %v42 = vld [vmem:[#allocation2] sm:$0x1]
    %v43 = vsel %vm38, 1, 0
    %v44 = vsel %vm39, 1, 0
    %v45 = vcvt.s32.f32 %v43
    %v46 = vcvt.s32.f32 %v44
    %vm47 = vcmask 130048
    %v48 = vsel %vm47, %v45, 0.0
    %v49 = vsel %vm47, %v46, 0.0
    %v50 = vadd.f32 %v48, %v49
    %v51 = vrot.slane %v50, 4
    %v52 = vadd.f32 %v50, %v51
    %v53 = vrot.slane %v52, 2
    %v54 = vadd.f32 %v52, %v53
    %v55 = vrot.slane %v54, 1
    %v56 = vadd.f32 %v54, %v55
    %v57 = vadd.f32 %v42, %v56
    %vm58 = vcmask 122880
    %59 = vst.msk [vmem:[#allocation2] sm:$0x1] %vm58, %v57
    %v60 = vld [vmem:[#allocation3] sm:$0x1]
    %v61 = vsel %vm47, %v40, 0.0
    %v62 = vsel %vm47, %v41, 0.0
    %v63 = vadd.f32 %v61, %v62
    %v64 = vrot.slane %v63, 4
    %v65 = vadd.f32 %v63, %v64
    %v66 = vrot.slane %v65, 2
    %v67 = vadd.f32 %v65, %v66
    %v68 = vrot.slane %v67, 1
    %v69 = vadd.f32 %v67, %v68
    %v70 = vadd.f32 %v60, %v69
    %71 = vst.msk [vmem:[#allocation3] sm:$0x1] %vm58, %v70
    %v72 = vld [vmem:[#allocation4] sm:$0x1]
    %v73 = vmul.f32 %v40, %v40
    %v74 = vmul.f32 %v41, %v41
    %v75 = vsel %vm47, %v73, 0.0
    %v76 = vsel %vm47, %v74, 0.0
    %v77 = vadd.f32 %v75, %v76
    %v78 = vrot.slane %v77, 4
    %v79 = vadd.f32 %v77, %v78
    %v80 = vrot.slane %v79, 2
    %v81 = vadd.f32 %v79, %v80
    %v82 = vrot.slane %v81, 1
    %v83 = vadd.f32 %v81, %v82
    %v84 = vadd.f32 %v72, %v83
    %85 = vst.msk [vmem:[#allocation4] sm:$0x1] %vm58, %v84
    // Predicated region
    $region14: #{tpu_custom_call.1} parent=1 // pred_check
      %p86 = pneg %p26
    $region15: #{tpu_custom_call.1} parent=1 // pred_check_branch
      %88 = sbr.rel (%p86) target = $region17
    $region16: #{tpu_custom_call.1} parent=1 // pred_region
      %v89 = vld [vmem:[#allocation2] sm:$0x1]
      %v90 = vld [vmem:[#allocation3] sm:$0x1]
      %v91 = vrcp.pop %v89
      %v92 = vmul.f32 %v90, %v91
      %v93 = vld [vmem:[#allocation4] sm:$0x1]
      %v94 = vmul.f32 %v89, %v92
      %v95 = vmul.f32 %v94, %v92
      %v96 = vsub.f32 %v93, %v95
      %v97 = vrcp.pop 15.0
      %v98 = vmul.f32 %v96, %v97
      %v99 = vmax.f32 %v98, 0.0
      %v100 = vrsqrt.pop %v99
      %v101 = vmul.f32 %v99, %v100
      %vm102 = vcmp.eq.f32.partialorder %v99, inf
      %v103 = vsel %vm102, %v99, %v101
      %vm104 = vcmp.eq.f32.partialorder %v99, 0.0
      %v105 = vand.u32 %v99, 2147483648
      %v106 = vsel %vm104, %v105, %v103
      %107 = vst.msk [vmem:[#allocation8] sm:$0x1] %vm58, %v92
      %v108 = vadd.f32 %v106, 1e-06
      %v109 = vrcp.pop %v108
      %v110 = vmul.f32 1.0, %v109
      %111 = vst.msk [vmem:[#allocation9] sm:$0x1] %vm58, %v110
    $region17: #{tpu_custom_call.1} parent=1 // pred_fallthru
      _
    // Predicated region
    $region18: #{tpu_custom_call.1} parent=1 // pred_check
      _
    $region19: #{tpu_custom_call.1} parent=1 // pred_check_branch
      %113 = sbr.rel (0) target = $region21
    $region20: #{tpu_custom_call.1} parent=1 // pred_region
      %s115 = ssub.s32 16, 16
      %116 = vsyncadd [#allocation7], %s115
      %s118 = sshll.u32 [#allocation8], 4
      %s119 = int_to_ptr.vmem [resolvable:$true] %s118
      %121 = dma.vmem_to_hbm [thread:$0]  %s119, 16, %s1, [#allocation7]
    $region21: #{tpu_custom_call.1} parent=1 // pred_fallthru
      _
    // Predicated region
    $region22: #{tpu_custom_call.1} parent=1 // pred_check
      _
    $region23: #{tpu_custom_call.1} parent=1 // pred_check_branch
      %123 = sbr.rel (0) target = $region25
    $region24: #{tpu_custom_call.1} parent=1 // pred_region
      %s125 = ssub.s32 16, 16
      %126 = vsyncadd [#allocation10], %s125
      %s128 = sshll.u32 [#allocation9], 4
      %s129 = int_to_ptr.vmem [resolvable:$true] %s128
      %131 = dma.vmem_to_hbm [thread:$0]  %s129, 16, %s2, [#allocation10]
    $region25: #{tpu_custom_call.1} parent=1 // pred_fallthru
      _
    // Predicated region
    $region26: #{tpu_custom_call.1} parent=1 // pred_check
      _
    $region27: #{tpu_custom_call.1} parent=1 // pred_check_branch
      %133 = sbr.rel (0) target = $region29
    $region28: #{tpu_custom_call.1} parent=1 // pred_region
      %134 = dma.done [#allocation7], 16
    $region29: #{tpu_custom_call.1} parent=1 // pred_fallthru
      _
    // Predicated region
    $region30: #{tpu_custom_call.1} parent=1 // pred_check
      _
    $region31: #{tpu_custom_call.1} parent=1 // pred_check_branch
      %136 = sbr.rel (0) target = $region33
    $region32: #{tpu_custom_call.1} parent=1 // pred_region
      %137 = dma.done [#allocation10], 16
    $region33: #{tpu_custom_call.1} parent=1 // pred_fallthru
      _
    %138 = vsyncpa [#allocation6], 1
    %139 = vsyncpa [#allocation7], 1
    %140 = vsyncpa [#allocation10], 1

</llo_original>
